<compile_context>
chip_gen: v5e
topology: v5e:2x2
jax: 0.10.0
libtpu: 0.0.40
codegen_flags: <defaults>
</compile_context>

<pallas_src>
import jax
import jax.numpy as jnp
from jax.experimental import pallas as pl
from jax.experimental.pallas import tpu as pltpu

LN_EPS = 1e-5  # PyTorch LayerNorm default


def dnm_kernel(x_ref, sn0_w_ref, sn0_b_ref, sw_ref, sb_ref, dnw_ref,
               dnw_sum_ref, dnb_sum_ref, o_ref):
    # x_ref:           (BT, D)    batch tile
    # sn0_w/b:         (1, D)     LayerNorm(in_channel) affine
    # sw/sb/dnw:       (O*M, D)   synapse params / dn weight tiled over O
    # dnw_sum/dnb_sum: (1, M)     sum_d dn_w[m, :], sum_d dn_b[m, :]
    # o_ref:           (BT, O)
    om_dim, d_dim = sw_ref.shape
    m_dim = dnw_sum_ref.shape[1]
    o_dim = om_dim // m_dim

    x = x_ref[...].astype(jnp.float32)
    bt = x.shape[0]

    # --- sn0: LayerNorm over in_channel D ---
    mu = jnp.mean(x, axis=-1, keepdims=True)
    xc = x - mu
    var = jnp.mean(xc * xc, axis=-1, keepdims=True)
    xn = xc * jax.lax.rsqrt(var + LN_EPS)
    xn = xn * sn0_w_ref[...] + sn0_b_ref[...]                  # (BT, D)

    # --- synapse: sigmoid(sw * x + sb), flattened over (O*M) ---
    s = jax.nn.sigmoid(sw_ref[...][None, :, :] * xn[:, None, :]
                       + sb_ref[...][None, :, :])              # (BT, O*M, D)

    # --- dn LayerNorm over (M, D) + D-sum, folded algebraically ---
    # One pass over the big tensor for each of sum, sum-of-squares and the
    # dn_w-weighted sum; `sn` is never materialized.  These lane reductions
    # run on the XLU slot, overlapping with the VPU/EUP synapse work.
    row_sum = jnp.sum(s, axis=-1)                              # (BT, O*M)
    row_sq = jnp.sum(s * s, axis=-1)                           # (BT, O*M)
    row_w = jnp.sum(s * dnw_ref[...][None, :, :], axis=-1)     # (BT, O*M)

    r_sum = row_sum.reshape(bt, o_dim, m_dim)
    r_sq = row_sq.reshape(bt, o_dim, m_dim)
    r_w = row_w.reshape(bt, o_dim, m_dim)

    inv_md = 1.0 / float(m_dim * d_dim)
    mu2 = jnp.sum(r_sum, axis=-1, keepdims=True) * inv_md      # (BT, O, 1)
    ex2 = jnp.sum(r_sq, axis=-1, keepdims=True) * inv_md       # (BT, O, 1)
    var2 = ex2 - mu2 * mu2                                     # biased var
    inv_std = jax.lax.rsqrt(var2 + LN_EPS)                     # (BT, O, 1)

    w_sum = dnw_sum_ref[...][None, :, :]                       # (1, 1, M)
    b_sum = dnb_sum_ref[...][None, :, :]                       # (1, 1, M)
    y = inv_std * (r_w - mu2 * w_sum) + b_sum                  # (BT, O, M)

    # --- dendrite: sigmoid, sum over branches ---
    z = jnp.sum(jax.nn.sigmoid(y), axis=-1)                    # (BT, O)

    # --- soma: softmax over out_channel ---
    z = z - jnp.max(z, axis=-1, keepdims=True)
    e = jnp.exp(z)
    out = e * pl.reciprocal(jnp.sum(e, axis=-1, keepdims=True), approx=True)

    o_ref[...] = out.astype(o_ref.dtype)


def dnm_forward(x, params, *, b_tile=256):
    """DNM forward; the batch is tiled over the Pallas grid.

    VMEM per grid step (f32, b_tile=256): resident params ~20 KB +
    double-buffered x/out tiles ~80 KB + the (BT, O*M, D) synapse working set
    (~1.3 MB; <4 MB with un-fused temporaries) -- far below the 32 MiB scoped
    limit and v7x's 64 MiB physical VMEM.
    """
    B, D = x.shape
    O, M, _ = params["sw"].shape

    sn0_w = params["sn0_w"].reshape(1, D)
    sn0_b = params["sn0_b"].reshape(1, D)
    sw = params["sw"].reshape(O * M, D)
    sb = params["sb"].reshape(O * M, D)
    dn_w = params["dn_w"]                                      # (M, D)
    dn_b = params["dn_b"]
    dnw_om = jnp.tile(dn_w, (O, 1))                            # (O*M, D)
    dnw_sum = jnp.sum(dn_w, axis=-1).reshape(1, M)             # sum_d dn_w
    dnb_sum = jnp.sum(dn_b, axis=-1).reshape(1, M)             # sum_d dn_b

    # Batch tiling: single full-batch block for small B (block == full dims
    # satisfies the (8,128) rule), otherwise 8-aligned tiles with the batch
    # padded up to a multiple of the tile.
    if B <= b_tile:
        bt, Bp = B, B
    else:
        bt = b_tile
        Bp = ((B + bt - 1) // bt) * bt
    xp = x if Bp == B else jnp.pad(x, ((0, Bp - B), (0, 0)))

    out = pl.pallas_call(
        dnm_kernel,
        out_shape=jax.ShapeDtypeStruct((Bp, O), x.dtype),
        grid=(Bp // bt,),
        in_specs=[
            pl.BlockSpec((bt, D), lambda i: (i, 0)),           # x: batch-tiled
            pl.BlockSpec((1, D), lambda i: (0, 0)),            # params resident
            pl.BlockSpec((1, D), lambda i: (0, 0)),
            pl.BlockSpec((O * M, D), lambda i: (0, 0)),
            pl.BlockSpec((O * M, D), lambda i: (0, 0)),
            pl.BlockSpec((O * M, D), lambda i: (0, 0)),
            pl.BlockSpec((1, M), lambda i: (0, 0)),
            pl.BlockSpec((1, M), lambda i: (0, 0)),
        ],
        out_specs=pl.BlockSpec((bt, O), lambda i: (i, 0)),
        compiler_params=pltpu.CompilerParams(
            # batch axis shards across v7x's 2 TensorCores; no-op on v5e/v6e
            dimension_semantics=("parallel",),
            vmem_limit_bytes=32 * 1024 * 1024,
        ),
    )(xp, sn0_w, sn0_b, sw, sb, dnw_om, dnw_sum, dnb_sum)

    return out if Bp == B else out[:B]


def dnm_reference(x, params):
    """Pure-JAX reference mirroring the PyTorch forward."""
    eps = LN_EPS
    mu = jnp.mean(x, axis=-1, keepdims=True)
    var = jnp.mean((x - mu) ** 2, axis=-1, keepdims=True)
    xn = (x - mu) / jnp.sqrt(var + eps) * params["sn0_w"] + params["sn0_b"]
    s = jax.nn.sigmoid(params["sw"][None] * xn[:, None, None, :]
                       + params["sb"][None])                   # (B, O, M, D)
    mu2 = jnp.mean(s, axis=(2, 3), keepdims=True)
    var2 = jnp.mean((s - mu2) ** 2, axis=(2, 3), keepdims=True)
    sn = (s - mu2) / jnp.sqrt(var2 + eps) * params["dn_w"] + params["dn_b"]
    y = jax.nn.sigmoid(jnp.sum(sn, axis=3))
    z = jnp.sum(y, axis=2)
    return jax.nn.softmax(z, axis=-1)


def init_params(key, in_channel, out_channel, num_branch):
    k_sw, k_sb = jax.random.split(key)
    return {
        # torch.randn-style params
        "sw": jax.random.normal(k_sw, (out_channel, num_branch, in_channel),
                                jnp.float32),
        "sb": jax.random.normal(k_sb, (out_channel, num_branch, in_channel),
                                jnp.float32),
        # LayerNorm default init: weight=1, bias=0
        "sn0_w": jnp.ones((in_channel,), jnp.float32),
        "sn0_b": jnp.zeros((in_channel,), jnp.float32),
        "dn_w": jnp.ones((num_branch, in_channel), jnp.float32),
        "dn_b": jnp.zeros((num_branch, in_channel), jnp.float32),
    }


if __name__ == "__main__":
    D, O, M = 32, 8, 5   # in_channel, out_channel, num_branch

    key = jax.random.PRNGKey(0)
    k_x, k_x2, k_p = jax.random.split(key, 3)
    params = init_params(k_p, D, O, M)

    # Small-batch path (single full-batch block).
    B = 2
    x = jax.random.normal(k_x, (B, D), jnp.float32)
    out = jax.block_until_ready(dnm_forward(x, params))
    ref = jax.block_until_ready(dnm_reference(x, params))
    assert out.shape == (B, O)
    # softmax rows sum to 1; tolerance covers the approx EUP reciprocal
    assert jnp.allclose(jnp.sum(out, axis=-1), 1.0, atol=5e-3)
    assert jnp.allclose(out, ref, atol=5e-3, rtol=5e-3)

    # Multi-tile path (batch padded to a multiple of b_tile, grid > 1).
    B2 = 300
    x2 = jax.random.normal(k_x2, (B2, D), jnp.float32)
    out2 = jax.block_until_ready(dnm_forward(x2, params))
    ref2 = jax.block_until_ready(dnm_reference(x2, params))
    assert out2.shape == (B2, O)
    assert jnp.allclose(jnp.sum(out2, axis=-1), 1.0, atol=5e-3)
    assert jnp.allclose(out2, ref2, atol=5e-3, rtol=5e-3)

    print("KERNEL_OK")
</pallas_src>

<mosaic_0001>
module attributes {stable_mosaic.version = 11 : i64} {
  func.func @dnm_kernel(%arg0: i32, %arg1: memref<2x32xf32, #tpu.memory_space<vmem>>, %arg2: memref<1x32xf32, #tpu.memory_space<vmem>>, %arg3: memref<1x32xf32, #tpu.memory_space<vmem>>, %arg4: memref<40x32xf32, #tpu.memory_space<vmem>>, %arg5: memref<40x32xf32, #tpu.memory_space<vmem>>, %arg6: memref<40x32xf32, #tpu.memory_space<vmem>>, %arg7: memref<1x5xf32, #tpu.memory_space<vmem>>, %arg8: memref<1x5xf32, #tpu.memory_space<vmem>>, %arg9: memref<2x8xf32, #tpu.memory_space<vmem>>) attributes {dimension_semantics = [#tpu.dimension_semantics<parallel>], iteration_bounds = array<i64: 1>, scalar_prefetch = 0 : i64, scratch_operands = 0 : i64, tpu.core_type = #tpu.core_type<tc>, window_params = [{transform_indices = @transform_0, window_bounds = array<i64: 2, 32>}, {pipeline_mode = #tpu.pipeline_mode<synchronous>, transform_indices = @transform_1, window_bounds = array<i64: 1, 32>}, {pipeline_mode = #tpu.pipeline_mode<synchronous>, transform_indices = @transform_2, window_bounds = array<i64: 1, 32>}, {pipeline_mode = #tpu.pipeline_mode<synchronous>, transform_indices = @transform_3, window_bounds = array<i64: 40, 32>}, {pipeline_mode = #tpu.pipeline_mode<synchronous>, transform_indices = @transform_4, window_bounds = array<i64: 40, 32>}, {pipeline_mode = #tpu.pipeline_mode<synchronous>, transform_indices = @transform_5, window_bounds = array<i64: 40, 32>}, {pipeline_mode = #tpu.pipeline_mode<synchronous>, transform_indices = @transform_6, window_bounds = array<i64: 1, 5>}, {pipeline_mode = #tpu.pipeline_mode<synchronous>, transform_indices = @transform_7, window_bounds = array<i64: 1, 5>}, {transform_indices = @transform_8, window_bounds = array<i64: 2, 8>}]} {
    %c0 = arith.constant 0 : index
    %c0_0 = arith.constant 0 : index
    %0 = vector.load %arg1[%c0, %c0_0] : memref<2x32xf32, #tpu.memory_space<vmem>>, vector<2x32xf32>
    %cst = arith.constant dense<0.000000e+00> : vector<2xf32>
    %1 = vector.multi_reduction <add>, %0, %cst [1] : vector<2x32xf32> to vector<2xf32>
    %2 = vector.shape_cast %1 : vector<2xf32> to vector<2x1xf32>
    %cst_1 = arith.constant 3.200000e+01 : f32
    %3 = vector.broadcast %cst_1 : f32 to vector<2x1xf32>
    %4 = arith.divf %2, %3 : vector<2x1xf32>
    %5 = vector.broadcast %4 : vector<2x1xf32> to vector<2x32xf32>
    %6 = arith.subf %0, %5 : vector<2x32xf32>
    %7 = arith.mulf %6, %6 : vector<2x32xf32>
    %cst_2 = arith.constant dense<0.000000e+00> : vector<2xf32>
    %8 = vector.multi_reduction <add>, %7, %cst_2 [1] : vector<2x32xf32> to vector<2xf32>
    %9 = vector.shape_cast %8 : vector<2xf32> to vector<2x1xf32>
    %cst_3 = arith.constant 3.200000e+01 : f32
    %10 = vector.broadcast %cst_3 : f32 to vector<2x1xf32>
    %11 = arith.divf %9, %10 : vector<2x1xf32>
    %cst_4 = arith.constant 9.99999974E-6 : f32
    %12 = vector.broadcast %cst_4 : f32 to vector<2x1xf32>
    %13 = arith.addf %11, %12 : vector<2x1xf32>
    %14 = math.rsqrt %13 : vector<2x1xf32>
    %15 = vector.broadcast %14 : vector<2x1xf32> to vector<2x32xf32>
    %16 = arith.mulf %6, %15 : vector<2x32xf32>
    %c0_5 = arith.constant 0 : index
    %c0_6 = arith.constant 0 : index
    %17 = vector.load %arg2[%c0_5, %c0_6] : memref<1x32xf32, #tpu.memory_space<vmem>>, vector<1x32xf32>
    %18 = vector.broadcast %17 : vector<1x32xf32> to vector<2x32xf32>
    %19 = arith.mulf %16, %18 : vector<2x32xf32>
    %c0_7 = arith.constant 0 : index
    %c0_8 = arith.constant 0 : index
    %20 = vector.load %arg3[%c0_7, %c0_8] : memref<1x32xf32, #tpu.memory_space<vmem>>, vector<1x32xf32>
    %21 = vector.broadcast %20 : vector<1x32xf32> to vector<2x32xf32>
    %22 = arith.addf %19, %21 : vector<2x32xf32>
    %c0_9 = arith.constant 0 : index
    %c0_10 = arith.constant 0 : index
    %23 = vector.load %arg4[%c0_9, %c0_10] : memref<40x32xf32, #tpu.memory_space<vmem>>, vector<40x32xf32>
    %24 = vector.shape_cast %23 : vector<40x32xf32> to vector<1x40x32xf32>
    %25 = vector.shape_cast %22 : vector<2x32xf32> to vector<2x1x32xf32>
    %26 = vector.broadcast %24 : vector<1x40x32xf32> to vector<2x40x32xf32>
    %27 = vector.broadcast %25 : vector<2x1x32xf32> to vector<2x40x32xf32>
    %28 = arith.mulf %26, %27 : vector<2x40x32xf32>
    %c0_11 = arith.constant 0 : index
    %c0_12 = arith.constant 0 : index
    %29 = vector.load %arg5[%c0_11, %c0_12] : memref<40x32xf32, #tpu.memory_space<vmem>>, vector<40x32xf32>
    %30 = vector.shape_cast %29 : vector<40x32xf32> to vector<1x40x32xf32>
    %31 = vector.broadcast %30 : vector<1x40x32xf32> to vector<2x40x32xf32>
    %32 = arith.addf %28, %31 : vector<2x40x32xf32>
    %33 = arith.negf %32 : vector<2x40x32xf32>
    %34 = math.exp %33 : vector<2x40x32xf32>
    %cst_13 = arith.constant 1.000000e+00 : f32
    %35 = vector.broadcast %cst_13 : f32 to vector<2x40x32xf32>
    %36 = arith.addf %35, %34 : vector<2x40x32xf32>
    %37 = arith.divf %35, %36 : vector<2x40x32xf32>
    %cst_14 = arith.constant dense<0.000000e+00> : vector<2x40xf32>
    %38 = vector.multi_reduction <add>, %37, %cst_14 [2] : vector<2x40x32xf32> to vector<2x40xf32>
    %39 = arith.mulf %37, %37 : vector<2x40x32xf32>
    %cst_15 = arith.constant dense<0.000000e+00> : vector<2x40xf32>
    %40 = vector.multi_reduction <add>, %39, %cst_15 [2] : vector<2x40x32xf32> to vector<2x40xf32>
    %c0_16 = arith.constant 0 : index
    %c0_17 = arith.constant 0 : index
    %41 = vector.load %arg6[%c0_16, %c0_17] : memref<40x32xf32, #tpu.memory_space<vmem>>, vector<40x32xf32>
    %42 = vector.shape_cast %41 : vector<40x32xf32> to vector<1x40x32xf32>
    %43 = vector.broadcast %42 : vector<1x40x32xf32> to vector<2x40x32xf32>
    %44 = arith.mulf %37, %43 : vector<2x40x32xf32>
    %cst_18 = arith.constant dense<0.000000e+00> : vector<2x40xf32>
    %45 = vector.multi_reduction <add>, %44, %cst_18 [2] : vector<2x40x32xf32> to vector<2x40xf32>
    %46 = vector.shape_cast %38 : vector<2x40xf32> to vector<2x8x5xf32>
    %47 = vector.shape_cast %40 : vector<2x40xf32> to vector<2x8x5xf32>
    %48 = vector.shape_cast %45 : vector<2x40xf32> to vector<2x8x5xf32>
    %cst_19 = arith.constant dense<0.000000e+00> : vector<2x8xf32>
    %49 = vector.multi_reduction <add>, %46, %cst_19 [2] : vector<2x8x5xf32> to vector<2x8xf32>
    %50 = vector.shape_cast %49 : vector<2x8xf32> to vector<2x8x1xf32>
    %cst_20 = arith.constant 6.250000e-03 : f32
    %51 = vector.broadcast %cst_20 : f32 to vector<2x8x1xf32>
    %52 = arith.mulf %50, %51 : vector<2x8x1xf32>
    %cst_21 = arith.constant dense<0.000000e+00> : vector<2x8xf32>
    %53 = vector.multi_reduction <add>, %47, %cst_21 [2] : vector<2x8x5xf32> to vector<2x8xf32>
    %54 = vector.shape_cast %53 : vector<2x8xf32> to vector<2x8x1xf32>
    %cst_22 = arith.constant 6.250000e-03 : f32
    %55 = vector.broadcast %cst_22 : f32 to vector<2x8x1xf32>
    %56 = arith.mulf %54, %55 : vector<2x8x1xf32>
    %57 = arith.mulf %52, %52 : vector<2x8x1xf32>
    %58 = arith.subf %56, %57 : vector<2x8x1xf32>
    %cst_23 = arith.constant 9.99999974E-6 : f32
    %59 = vector.broadcast %cst_23 : f32 to vector<2x8x1xf32>
    %60 = arith.addf %58, %59 : vector<2x8x1xf32>
    %61 = math.rsqrt %60 : vector<2x8x1xf32>
    %c0_24 = arith.constant 0 : index
    %c0_25 = arith.constant 0 : index
    %62 = vector.load %arg7[%c0_24, %c0_25] : memref<1x5xf32, #tpu.memory_space<vmem>>, vector<1x5xf32>
    %63 = vector.shape_cast %62 : vector<1x5xf32> to vector<1x1x5xf32>
    %c0_26 = arith.constant 0 : index
    %c0_27 = arith.constant 0 : index
    %64 = vector.load %arg8[%c0_26, %c0_27] : memref<1x5xf32, #tpu.memory_space<vmem>>, vector<1x5xf32>
    %65 = vector.shape_cast %64 : vector<1x5xf32> to vector<1x1x5xf32>
    %66 = vector.broadcast %52 : vector<2x8x1xf32> to vector<2x8x5xf32>
    %67 = vector.broadcast %63 : vector<1x1x5xf32> to vector<2x8x5xf32>
    %68 = arith.mulf %66, %67 : vector<2x8x5xf32>
    %69 = arith.subf %48, %68 : vector<2x8x5xf32>
    %70 = vector.broadcast %61 : vector<2x8x1xf32> to vector<2x8x5xf32>
    %71 = arith.mulf %70, %69 : vector<2x8x5xf32>
    %72 = vector.broadcast %65 : vector<1x1x5xf32> to vector<2x8x5xf32>
    %73 = arith.addf %71, %72 : vector<2x8x5xf32>
    %74 = arith.negf %73 : vector<2x8x5xf32>
    %75 = math.exp %74 : vector<2x8x5xf32>
    %cst_28 = arith.constant 1.000000e+00 : f32
    %76 = vector.broadcast %cst_28 : f32 to vector<2x8x5xf32>
    %77 = arith.addf %76, %75 : vector<2x8x5xf32>
    %78 = arith.divf %76, %77 : vector<2x8x5xf32>
    %cst_29 = arith.constant dense<0.000000e+00> : vector<2x8xf32>
    %79 = vector.multi_reduction <add>, %78, %cst_29 [2] : vector<2x8x5xf32> to vector<2x8xf32>
    %cst_30 = arith.constant dense<0xFF800000> : vector<2xf32>
    %80 = vector.multi_reduction <maximumf>, %79, %cst_30 [1] : vector<2x8xf32> to vector<2xf32>
    %81 = vector.shape_cast %80 : vector<2xf32> to vector<2x1xf32>
    %82 = vector.broadcast %81 : vector<2x1xf32> to vector<2x8xf32>
    %83 = arith.subf %79, %82 : vector<2x8xf32>
    %84 = math.exp %83 : vector<2x8xf32>
    %cst_31 = arith.constant dense<0.000000e+00> : vector<2xf32>
    %85 = vector.multi_reduction <add>, %84, %cst_31 [1] : vector<2x8xf32> to vector<2xf32>
    %86 = vector.shape_cast %85 : vector<2xf32> to vector<2x1xf32>
    %87 = tpu.reciprocal %86 {approx = true} : vector<2x1xf32> -> vector<2x1xf32>
    %88 = vector.broadcast %87 : vector<2x1xf32> to vector<2x8xf32>
    %89 = arith.mulf %84, %88 : vector<2x8xf32>
    %c0_32 = arith.constant 0 : index
    %c0_33 = arith.constant 0 : index
    %90 = vector.load %arg9[%c0_32, %c0_33] : memref<2x8xf32, #tpu.memory_space<vmem>>, vector<2x8xf32>
    tpu.vector_store %arg9[%c0_32, %c0_33], %89 {strides = array<i32>} : memref<2x8xf32, #tpu.memory_space<vmem>>, vector<2x8xf32>,
    return
  }
  func.func @transform_0(%arg0: i32) -> (i32, i32) {
    %c0_i32 = arith.constant 0 : i32
    %c0_i32_0 = arith.constant 0 : i32
    return %arg0, %c0_i32 : i32, i32
  }
  func.func @transform_1(%arg0: i32) -> (i32, i32) {
    %c0_i32 = arith.constant 0 : i32
    %c0_i32_0 = arith.constant 0 : i32
    %c0_i32_1 = arith.constant 0 : i32
    return %c0_i32, %c0_i32_0 : i32, i32
  }
  func.func @transform_2(%arg0: i32) -> (i32, i32) {
    %c0_i32 = arith.constant 0 : i32
    %c0_i32_0 = arith.constant 0 : i32
    %c0_i32_1 = arith.constant 0 : i32
    return %c0_i32, %c0_i32_0 : i32, i32
  }
  func.func @transform_3(%arg0: i32) -> (i32, i32) {
    %c0_i32 = arith.constant 0 : i32
    %c0_i32_0 = arith.constant 0 : i32
    %c0_i32_1 = arith.constant 0 : i32
    return %c0_i32, %c0_i32_0 : i32, i32
  }
  func.func @transform_4(%arg0: i32) -> (i32, i32) {
    %c0_i32 = arith.constant 0 : i32
    %c0_i32_0 = arith.constant 0 : i32
    %c0_i32_1 = arith.constant 0 : i32
    return %c0_i32, %c0_i32_0 : i32, i32
  }
  func.func @transform_5(%arg0: i32) -> (i32, i32) {
    %c0_i32 = arith.constant 0 : i32
    %c0_i32_0 = arith.constant 0 : i32
    %c0_i32_1 = arith.constant 0 : i32
    return %c0_i32, %c0_i32_0 : i32, i32
  }
  func.func @transform_6(%arg0: i32) -> (i32, i32) {
    %c0_i32 = arith.constant 0 : i32
    %c0_i32_0 = arith.constant 0 : i32
    %c0_i32_1 = arith.constant 0 : i32
    return %c0_i32, %c0_i32_0 : i32, i32
  }
  func.func @transform_7(%arg0: i32) -> (i32, i32) {
    %c0_i32 = arith.constant 0 : i32
    %c0_i32_0 = arith.constant 0 : i32
    %c0_i32_1 = arith.constant 0 : i32
    return %c0_i32, %c0_i32_0 : i32, i32
  }
  func.func @transform_8(%arg0: i32) -> (i32, i32) {
    %c0_i32 = arith.constant 0 : i32
    %c0_i32_0 = arith.constant 0 : i32
    return %arg0, %c0_i32 : i32, i32
  }
}

</mosaic_0001>

<llo_original>
// kernel: tpu_custom_call.1
$region0: #{tpu_custom_call.1}
  #allocation0 [shape = 'u32[]', space=smem, size = 0x4, offset = 0x4, fixed_abs, tag = 'smem constant byte address 0x4 - core index']
  #allocation1 [shape = 'u32[72,128]{1,0:T(1,128)}', space=vmem, size = 0x9000, scoped, tag = 'internal scratch']
  %s0 = inlined_call_operand.vmem [shape: f32[2,32], index: 0, kind: input, shape index: {}]
  %s1 = inlined_call_operand.vmem [shape: f32[1,32], index: 1, kind: input, shape index: {}]
  %s2 = inlined_call_operand.vmem [shape: f32[1,32], index: 2, kind: input, shape index: {}]
  %s3 = inlined_call_operand.vmem [shape: f32[40,32], index: 3, kind: input, shape index: {}]
  %s4 = inlined_call_operand.vmem [shape: f32[40,32], index: 4, kind: input, shape index: {}]
  %s5 = inlined_call_operand.vmem [shape: f32[40,32], index: 5, kind: input, shape index: {}]
  %s6 = inlined_call_operand.vmem [shape: f32[1,5], index: 6, kind: input, shape index: {}]
  %s7 = inlined_call_operand.vmem [shape: f32[1,5], index: 7, kind: input, shape index: {}]
  %s8 = inlined_call_operand.hbm [shape: f32[2,8], index: 8, kind: output, shape index: {}]
  %s9 = sld [smem:[#allocation0]]
  $region42: #{tpu_custom_call.1} parent=0
    _
  %s11 = ssub.s32 1, %s9
  %s12 = scalar_select 0, %s11, %s9
  $region1: #{tpu_custom_call.1} parent=0
    #allocation2 [shape = 'u8[1024]{0}', space=vmem, size = 0x400, scoped, tag = 'output window, operand 0, single buffered']
    #allocation3 [shape = 's32[1]{0}', space=sflag, size = 0x4, scoped, tag = 'scoped memory for tpu_custom_call.1']
    %13 = vsyncpa [#allocation3], 0
    // Predicated region
    $region2: #{tpu_custom_call.1} parent=1 // pred_check
      _
    $region3: #{tpu_custom_call.1} parent=1 // pred_check_branch
      %15 = sbr.rel (0) target = $region5
    $region4: #{tpu_custom_call.1} parent=1 // pred_region
      _
    $region5: #{tpu_custom_call.1} parent=1 // pred_fallthru
      _
    // Predicated region
    $region6: #{tpu_custom_call.1} parent=1 // pred_check
      _
    $region7: #{tpu_custom_call.1} parent=1 // pred_check_branch
      %17 = sbr.rel (0) target = $region9
    $region8: #{tpu_custom_call.1} parent=1 // pred_region
      _
    $region9: #{tpu_custom_call.1} parent=1 // pred_fallthru
      _
    // Predicated region
    $region10: #{tpu_custom_call.1} parent=1 // pred_check
      _
    $region11: #{tpu_custom_call.1} parent=1 // pred_check_branch
      %19 = sbr.rel (0) target = $region13
    $region12: #{tpu_custom_call.1} parent=1 // pred_region
      _
    $region13: #{tpu_custom_call.1} parent=1 // pred_fallthru
      _
    // Predicated region
    $region14: #{tpu_custom_call.1} parent=1 // pred_check
      _
    $region15: #{tpu_custom_call.1} parent=1 // pred_check_branch
      %21 = sbr.rel (0) target = $region17
    $region16: #{tpu_custom_call.1} parent=1 // pred_region
      _
    $region17: #{tpu_custom_call.1} parent=1 // pred_fallthru
      _
    // Predicated region
    $region18: #{tpu_custom_call.1} parent=1 // pred_check
      _
    $region19: #{tpu_custom_call.1} parent=1 // pred_check_branch
      %23 = sbr.rel (0) target = $region21
    $region20: #{tpu_custom_call.1} parent=1 // pred_region
      _
    $region21: #{tpu_custom_call.1} parent=1 // pred_fallthru
      _
    // Predicated region
    $region22: #{tpu_custom_call.1} parent=1 // pred_check
      _
    $region23: #{tpu_custom_call.1} parent=1 // pred_check_branch
      %25 = sbr.rel (0) target = $region25
    $region24: #{tpu_custom_call.1} parent=1 // pred_region
      _
    $region25: #{tpu_custom_call.1} parent=1 // pred_fallthru
      _
    // Predicated region
    $region26: #{tpu_custom_call.1} parent=1 // pred_check
      _
    $region27: #{tpu_custom_call.1} parent=1 // pred_check_branch
      %27 = sbr.rel (0) target = $region29
    $region28: #{tpu_custom_call.1} parent=1 // pred_region
      _
    $region29: #{tpu_custom_call.1} parent=1 // pred_fallthru
      _
    // Predicated region
    $region30: #{tpu_custom_call.1} parent=1 // pred_check
      _
    $region31: #{tpu_custom_call.1} parent=1 // pred_check_branch
      %29 = sbr.rel (0) target = $region33
    $region32: #{tpu_custom_call.1} parent=1 // pred_region
      _
    $region33: #{tpu_custom_call.1} parent=1 // pred_fallthru
      _
    %v30 = vld [vmem:[%s0] sm:$0x3]
    %vm31 = vcmask 254976
    %v32 = vsel %vm31, %v30, 0.0
    %33 = vadd.xlane.f32.xlu0 %v32
    %v34 = vpop.xlane.xlu0 %33
    %v35 = vrcp.pop 32.0
    %v36 = vmul.f32 32.0, %v35
    %v37 = vsub.f32 1.0, %v36
    %v38 = vmul.f32 %v35, %v37
    %v39 = vadd.f32 %v35, %v38
    %vm40 = vweird.f32 %v35
    %v41 = vsel %vm40, %v35, %v39
    %v42 = vmul.f32 %v34, %v41
    %v43 = vsub.f32 %v30, %v42
    %v44 = vmul.f32 %v43, %v43
    %v45 = vsel %vm31, %v44, 0.0
    %46 = vadd.xlane.f32.xlu0 %v45
    %v47 = vpop.xlane.xlu0 %46
    %v48 = vmul.f32 %v47, %v41
    %v49 = vadd.f32 %v48, 1e-05
    %v50 = vrsqrt.pop %v49
    %v51 = vmul.f32 %v50, %v49
    %v52 = vmul.f32 %v51, %v50
    %v53 = vmul.f32 0.5, %v52
    %v54 = vsub.f32 1.5, %v53
    %v55 = vmul.f32 %v50, %v54
    %vm56 = vweird.f32 %v49
    %vm57 = vweird.f32 %v50
    %vm58 = vmor %vm56, %vm57
    %v59 = vsel %vm58, %v50, %v55
    %v60 = vmul.f32 %v43, %v59
    %v61 = vld [vmem:[%s1] sm:$0x1]
    %v63 = vperm.slane %v61, 0
    %v65 = vmul.f32 %v60, %v63
    %v66 = vld [vmem:[%s2] sm:$0x1]
    %v68 = vperm.slane %v66, 0
    %v70 = vadd.f32 %v65, %v68
    %v71 = vld [vmem:[%s3] sm:$0xff]
    %v72 = vld [vmem:[%s3 + $0x8] sm:$0xff]
    %v73 = vld [vmem:[%s3 + $0x10] sm:$0xff]
    %v74 = vld [vmem:[%s3 + $0x18] sm:$0xff]
    %v75 = vld [vmem:[%s3 + $0x20] sm:$0xff]
    %v77 = vrot.slane %v70, 1
    %v78 = vperm.slane %v70, 0
    %v79 = vperm.slane %v77, 0
    %v82 = vmul.f32 %v71, %v78
    %v83 = vmul.f32 %v72, %v78
    %v84 = vmul.f32 %v73, %v78
    %v85 = vmul.f32 %v74, %v78
    %v86 = vmul.f32 %v75, %v78
    %v87 = vmul.f32 %v71, %v79
    %v88 = vmul.f32 %v72, %v79
    %v89 = vmul.f32 %v73, %v79
    %v90 = vmul.f32 %v74, %v79
    %v91 = vmul.f32 %v75, %v79
    %v92 = vld [vmem:[%s4] sm:$0xff]
    %v93 = vld [vmem:[%s4 + $0x8] sm:$0xff]
    %v94 = vld [vmem:[%s4 + $0x10] sm:$0xff]
    %v95 = vld [vmem:[%s4 + $0x18] sm:$0xff]
    %v96 = vld [vmem:[%s4 + $0x20] sm:$0xff]
    %v97 = vadd.f32 %v82, %v92
    %v98 = vadd.f32 %v83, %v93
    %v99 = vadd.f32 %v84, %v94
    %v100 = vadd.f32 %v85, %v95
    %v101 = vadd.f32 %v86, %v96
    %v102 = vadd.f32 %v87, %v92
    %v103 = vadd.f32 %v88, %v93
    %v104 = vadd.f32 %v89, %v94
    %v105 = vadd.f32 %v90, %v95
    %v106 = vadd.f32 %v91, %v96
    %v107 = vxor.u32 %v97, 2147483648
    %v108 = vxor.u32 %v98, 2147483648
    %v109 = vxor.u32 %v99, 2147483648
    %v110 = vxor.u32 %v100, 2147483648
    %v111 = vxor.u32 %v101, 2147483648
    %v112 = vxor.u32 %v102, 2147483648
    %v113 = vxor.u32 %v103, 2147483648
    %v114 = vxor.u32 %v104, 2147483648
    %v115 = vxor.u32 %v105, 2147483648
    %v116 = vxor.u32 %v106, 2147483648
    %v117 = vmul.f32 %v107, 1.442695
    %v118 = vpow.pop %v117
    %v119 = vmul.f32 %v108, 1.442695
    %v120 = vpow.pop %v119
    %v121 = vmul.f32 %v109, 1.442695
    %v122 = vpow.pop %v121
    %v123 = vmul.f32 %v110, 1.442695
    %v124 = vpow.pop %v123
    %v125 = vmul.f32 %v111, 1.442695
    %v126 = vpow.pop %v125
    %v127 = vmul.f32 %v112, 1.442695
    %v128 = vpow.pop %v127
    %v129 = vmul.f32 %v113, 1.442695
    %v130 = vpow.pop %v129
    %v131 = vmul.f32 %v114, 1.442695
    %v132 = vpow.pop %v131
    %v133 = vmul.f32 %v115, 1.442695
    %v134 = vpow.pop %v133
    %v135 = vmul.f32 %v116, 1.442695
    %v136 = vpow.pop %v135
    %v137 = vadd.f32 %v118, 1.0
    %v138 = vadd.f32 %v120, 1.0
    %v139 = vadd.f32 %v122, 1.0
    %v140 = vadd.f32 %v124, 1.0
    %v141 = vadd.f32 %v126, 1.0
    %v142 = vadd.f32 %v128, 1.0
    %v143 = vadd.f32 %v130, 1.0
    %v144 = vadd.f32 %v132, 1.0
    %v145 = vadd.f32 %v134, 1.0
    %v146 = vadd.f32 %v136, 1.0
    %v147 = vrcp.pop %v137
    %v148 = vmul.f32 %v137, %v147
    %v149 = vsub.f32 1.0, %v148
    %v150 = vmul.f32 %v147, %v149
    %v151 = vadd.f32 %v147, %v150
    %vm152 = vweird.f32 %v137
    %vm153 = vweird.f32 %v147
    %vm154 = vmor %vm152, %vm153
    %v155 = vsel %vm154, %v147, %v151
    %v156 = vand.u32 2147483647, %v137
    %vm157 = vcmp.eq.f32.partialorder %v156, 8.507059e+37
    %v158 = vand.u32 %v137, 2147483648
    %v159 = vor.u32 1.1754944e-38, %v158
    %v160 = vsel %vm157, %v159, %v155
    %v161 = vmul.f32 1.0, %v160
    %v162 = vrcp.pop %v138
    %v163 = vmul.f32 %v138, %v162
    %v164 = vsub.f32 1.0, %v163
    %v165 = vmul.f32 %v162, %v164
    %v166 = vadd.f32 %v162, %v165
    %vm167 = vweird.f32 %v138
    %vm168 = vweird.f32 %v162
    %vm169 = vmor %vm167, %vm168
    %v170 = vsel %vm169, %v162, %v166
    %v171 = vand.u32 2147483647, %v138
    %vm172 = vcmp.eq.f32.partialorder %v171, 8.507059e+37
    %v173 = vand.u32 %v138, 2147483648
    %v174 = vor.u32 1.1754944e-38, %v173
    %v175 = vsel %vm172, %v174, %v170
    %v176 = vmul.f32 1.0, %v175
    %v177 = vrcp.pop %v139
    %v178 = vmul.f32 %v139, %v177
    %v179 = vsub.f32 1.0, %v178
    %v180 = vmul.f32 %v177, %v179
    %v181 = vadd.f32 %v177, %v180
    %vm182 = vweird.f32 %v139
    %vm183 = vweird.f32 %v177
    %vm184 = vmor %vm182, %vm183
    %v185 = vsel %vm184, %v177, %v181
    %v186 = vand.u32 2147483647, %v139
    %vm187 = vcmp.eq.f32.partialorder %v186, 8.507059e+37
    %v188 = vand.u32 %v139, 2147483648
    %v189 = vor.u32 1.1754944e-38, %v188
    %v190 = vsel %vm187, %v189, %v185
    %v191 = vmul.f32 1.0, %v190
    %v192 = vrcp.pop %v140
    %v193 = vmul.f32 %v140, %v192
    %v194 = vsub.f32 1.0, %v193
    %v195 = vmul.f32 %v192, %v194
    %v196 = vadd.f32 %v192, %v195
    %vm197 = vweird.f32 %v140
    %vm198 = vweird.f32 %v192
    %vm199 = vmor %vm197, %vm198
    %v200 = vsel %vm199, %v192, %v196
    %v201 = vand.u32 2147483647, %v140
    %vm202 = vcmp.eq.f32.partialorder %v201, 8.507059e+37
    %v203 = vand.u32 %v140, 2147483648
    %v204 = vor.u32 1.1754944e-38, %v203
    %v205 = vsel %vm202, %v204, %v200
    %v206 = vmul.f32 1.0, %v205
    %v207 = vrcp.pop %v141
    %v208 = vmul.f32 %v141, %v207
    %v209 = vsub.f32 1.0, %v208
    %v210 = vmul.f32 %v207, %v209
    %v211 = vadd.f32 %v207, %v210
    %vm212 = vweird.f32 %v141
    %vm213 = vweird.f32 %v207
    %vm214 = vmor %vm212, %vm213
    %v215 = vsel %vm214, %v207, %v211
    %v216 = vand.u32 2147483647, %v141
    %vm217 = vcmp.eq.f32.partialorder %v216, 8.507059e+37
    %v218 = vand.u32 %v141, 2147483648
    %v219 = vor.u32 1.1754944e-38, %v218
    %v220 = vsel %vm217, %v219, %v215
    %v221 = vmul.f32 1.0, %v220
    %v222 = vrcp.pop %v142
    %v223 = vmul.f32 %v142, %v222
    %v224 = vsub.f32 1.0, %v223
    %v225 = vmul.f32 %v222, %v224
    %v226 = vadd.f32 %v222, %v225
    %vm227 = vweird.f32 %v142
    %vm228 = vweird.f32 %v222
    %vm229 = vmor %vm227, %vm228
    %v230 = vsel %vm229, %v222, %v226
    %v231 = vand.u32 2147483647, %v142
    %vm232 = vcmp.eq.f32.partialorder %v231, 8.507059e+37
    %v233 = vand.u32 %v142, 2147483648
    %v234 = vor.u32 1.1754944e-38, %v233
    %v235 = vsel %vm232, %v234, %v230
    %v236 = vmul.f32 1.0, %v235
    %v237 = vrcp.pop %v143
    %v238 = vmul.f32 %v143, %v237
    %v239 = vsub.f32 1.0, %v238
    %v240 = vmul.f32 %v237, %v239
    %v241 = vadd.f32 %v237, %v240
    %vm242 = vweird.f32 %v143
    %vm243 = vweird.f32 %v237
    %vm244 = vmor %vm242, %vm243
    %v245 = vsel %vm244, %v237, %v241
    %v246 = vand.u32 2147483647, %v143
    %vm247 = vcmp.eq.f32.partialorder %v246, 8.507059e+37
    %v248 = vand.u32 %v143, 2147483648
    %v249 = vor.u32 1.1754944e-38, %v248
    %v250 = vsel %vm247, %v249, %v245
    %v251 = vmul.f32 1.0, %v250
    %v252 = vrcp.pop %v144
    %v253 = vmul.f32 %v144, %v252
    %v254 = vsub.f32 1.0, %v253
    %v255 = vmul.f32 %v252, %v254
    %v256 = vadd.f32 %v252, %v255
    %vm257 = vweird.f32 %v144
    %vm258 = vweird.f32 %v252
    %vm259 = vmor %vm257, %vm258
    %v260 = vsel %vm259, %v252, %v256
    %v261 = vand.u32 2147483647, %v144
    %vm262 = vcmp.eq.f32.partialorder %v261, 8.507059e+37
    %v263 = vand.u32 %v144, 2147483648
    %v264 = vor.u32 1.1754944e-38, %v263
    %v265 = vsel %vm262, %v264, %v260
    %v266 = vmul.f32 1.0, %v265
    %v267 = vrcp.pop %v145
    %v268 = vmul.f32 %v145, %v267
    %v269 = vsub.f32 1.0, %v268
    %v270 = vmul.f32 %v267, %v269
    %v271 = vadd.f32 %v267, %v270
    %vm272 = vweird.f32 %v145
    %vm273 = vweird.f32 %v267
    %vm274 = vmor %vm272, %vm273
    %v275 = vsel %vm274, %v267, %v271
    %v276 = vand.u32 2147483647, %v145
    %vm277 = vcmp.eq.f32.partialorder %v276, 8.507059e+37
    %v278 = vand.u32 %v145, 2147483648
    %v279 = vor.u32 1.1754944e-38, %v278
    %v280 = vsel %vm277, %v279, %v275
    %v281 = vmul.f32 1.0, %v280
    %v282 = vrcp.pop %v146
    %v283 = vmul.f32 %v146, %v282
    %v284 = vsub.f32 1.0, %v283
    %v285 = vmul.f32 %v282, %v284
    %v286 = vadd.f32 %v282, %v285
    %vm287 = vweird.f32 %v146
    %vm288 = vweird.f32 %v282
    %vm289 = vmor %vm287, %vm288
    %v290 = vsel %vm289, %v282, %v286
    %v291 = vand.u32 2147483647, %v146
    %vm292 = vcmp.eq.f32.partialorder %v291, 8.507059e+37
    %v293 = vand.u32 %v146, 2147483648
    %v294 = vor.u32 1.1754944e-38, %v293
    %v295 = vsel %vm292, %v294, %v290
    %v296 = vmul.f32 1.0, %v295
    %vm297 = vcmask 261120
    %v298 = vsel %vm297, %v161, 0.0
    %299 = vadd.xlane.f32.xlu0 %v298
    %v300 = vpop.xlane.xlu0 %299
    %v301 = vsel %vm297, %v176, 0.0
    %302 = vadd.xlane.f32.xlu0 %v301
    %v303 = vpop.xlane.xlu0 %302
    %v304 = vsel %vm297, %v191, 0.0
    %305 = vadd.xlane.f32.xlu0 %v304
    %v306 = vpop.xlane.xlu0 %305
    %v307 = vsel %vm297, %v206, 0.0
    %308 = vadd.xlane.f32.xlu0 %v307
    %v309 = vpop.xlane.xlu0 %308
    %v310 = vsel %vm297, %v221, 0.0
    %311 = vadd.xlane.f32.xlu0 %v310
    %v312 = vpop.xlane.xlu0 %311
    %v313 = vsel %vm297, %v236, 0.0
    %314 = vadd.xlane.f32.xlu0 %v313
    %v315 = vpop.xlane.xlu0 %314
    %v316 = vsel %vm297, %v251, 0.0
    %317 = vadd.xlane.f32.xlu0 %v316
    %v318 = vpop.xlane.xlu0 %317
    %v319 = vsel %vm297, %v266, 0.0
    %320 = vadd.xlane.f32.xlu0 %v319
    %v321 = vpop.xlane.xlu0 %320
    %v322 = vsel %vm297, %v281, 0.0
    %323 = vadd.xlane.f32.xlu0 %v322
    %v324 = vpop.xlane.xlu0 %323
    %v325 = vsel %vm297, %v296, 0.0
    %326 = vadd.xlane.f32.xlu0 %v325
    %v327 = vpop.xlane.xlu0 %326
    %v328 = vmul.f32 %v161, %v161
    %v329 = vmul.f32 %v176, %v176
    %v330 = vmul.f32 %v191, %v191
    %v331 = vmul.f32 %v206, %v206
    %v332 = vmul.f32 %v221, %v221
    %v333 = vmul.f32 %v236, %v236
    %v334 = vmul.f32 %v251, %v251
    %v335 = vmul.f32 %v266, %v266
    %v336 = vmul.f32 %v281, %v281
    %v337 = vmul.f32 %v296, %v296
    %v338 = vsel %vm297, %v328, 0.0
    %339 = vadd.xlane.f32.xlu0 %v338
    %v340 = vpop.xlane.xlu0 %339
    %v341 = vsel %vm297, %v329, 0.0
    %342 = vadd.xlane.f32.xlu0 %v341
    %v343 = vpop.xlane.xlu0 %342
    %v344 = vsel %vm297, %v330, 0.0
    %345 = vadd.xlane.f32.xlu0 %v344
    %v346 = vpop.xlane.xlu0 %345
    %v347 = vsel %vm297, %v331, 0.0
    %348 = vadd.xlane.f32.xlu0 %v347
    %v349 = vpop.xlane.xlu0 %348
    %v350 = vsel %vm297, %v332, 0.0
    %351 = vadd.xlane.f32.xlu0 %v350
    %v352 = vpop.xlane.xlu0 %351
    %v353 = vsel %vm297, %v333, 0.0
    %354 = vadd.xlane.f32.xlu0 %v353
    %v355 = vpop.xlane.xlu0 %354
    %v356 = vsel %vm297, %v334, 0.0
    %357 = vadd.xlane.f32.xlu0 %v356
    %v358 = vpop.xlane.xlu0 %357
    %v359 = vsel %vm297, %v335, 0.0
    %360 = vadd.xlane.f32.xlu0 %v359
    %v361 = vpop.xlane.xlu0 %360
    %v362 = vsel %vm297, %v336, 0.0
    %363 = vadd.xlane.f32.xlu0 %v362
    %v364 = vpop.xlane.xlu0 %363
    %v365 = vsel %vm297, %v337, 0.0
    %366 = vadd.xlane.f32.xlu0 %v365
    %v367 = vpop.xlane.xlu0 %366
    %v368 = vld [vmem:[%s5] sm:$0xff]
    %v369 = vld [vmem:[%s5 + $0x8] sm:$0xff]
    %v370 = vld [vmem:[%s5 + $0x10] sm:$0xff]
    %v371 = vld [vmem:[%s5 + $0x18] sm:$0xff]
    %v372 = vld [vmem:[%s5 + $0x20] sm:$0xff]
    %v373 = vmul.f32 %v161, %v368
    %v374 = vmul.f32 %v176, %v369
    %v375 = vmul.f32 %v191, %v370
    %v376 = vmul.f32 %v206, %v371
    %v377 = vmul.f32 %v221, %v372
    %v378 = vmul.f32 %v236, %v368
    %v379 = vmul.f32 %v251, %v369
    %v380 = vmul.f32 %v266, %v370
    %v381 = vmul.f32 %v281, %v371
    %v382 = vmul.f32 %v296, %v372
    %v383 = vsel %vm297, %v373, 0.0
    %384 = vadd.xlane.f32.xlu0 %v383
    %v385 = vpop.xlane.xlu0 %384
    %v386 = vsel %vm297, %v374, 0.0
    %387 = vadd.xlane.f32.xlu0 %v386
    %v388 = vpop.xlane.xlu0 %387
    %v389 = vsel %vm297, %v375, 0.0
    %390 = vadd.xlane.f32.xlu0 %v389
    %v391 = vpop.xlane.xlu0 %390
    %v392 = vsel %vm297, %v376, 0.0
    %393 = vadd.xlane.f32.xlu0 %v392
    %v394 = vpop.xlane.xlu0 %393
    %v395 = vsel %vm297, %v377, 0.0
    %396 = vadd.xlane.f32.xlu0 %v395
    %v397 = vpop.xlane.xlu0 %396
    %v398 = vsel %vm297, %v378, 0.0
    %399 = vadd.xlane.f32.xlu0 %v398
    %v400 = vpop.xlane.xlu0 %399
    %v401 = vsel %vm297, %v379, 0.0
    %402 = vadd.xlane.f32.xlu0 %v401
    %v403 = vpop.xlane.xlu0 %402
    %v404 = vsel %vm297, %v380, 0.0
    %405 = vadd.xlane.f32.xlu0 %v404
    %v406 = vpop.xlane.xlu0 %405
    %v407 = vsel %vm297, %v381, 0.0
    %408 = vadd.xlane.f32.xlu0 %v407
    %v409 = vpop.xlane.xlu0 %408
    %v410 = vsel %vm297, %v382, 0.0
    %411 = vadd.xlane.f32.xlu0 %v410
    %v412 = vpop.xlane.xlu0 %411
    %vm417 = vcmask 1042432
    %v418 = vrot.slane %v300, 5
    %v419 = vrot.slane %v303, 5
    %v420 = vsel %vm417, %v418, %v419
    %v421 = vrot.slane %v315, 5
    %v422 = vrot.slane %v318, 5
    %v423 = vsel %vm417, %v421, %v422
    %v424 = vrot.slane %v303, 2
    %v425 = vrot.slane %v318, 2
    %vm428 = vcmask 1040384
    %v429 = vrot.slane %v303, 7
    %v430 = vrot.slane %v306, 7
    %v431 = vsel %vm428, %v429, %v430
    %v432 = vrot.slane %v318, 7
    %v433 = vrot.slane %v321, 7
    %v434 = vsel %vm428, %v432, %v433
    %vm437 = vcmask 1043456
    %v438 = vrot.slane %v306, 4
    %v439 = vrot.slane %v309, 4
    %v440 = vsel %vm437, %v438, %v439
    %v441 = vrot.slane %v321, 4
    %v442 = vrot.slane %v324, 4
    %v443 = vsel %vm437, %v441, %v442
    %v444 = vrot.slane %v309, 1
    %v445 = vrot.slane %v324, 1
    %vm448 = vcmask 1041408
    %v449 = vrot.slane %v309, 6
    %v450 = vrot.slane %v312, 6
    %v451 = vsel %vm448, %v449, %v450
    %v452 = vrot.slane %v324, 6
    %v453 = vrot.slane %v327, 6
    %v454 = vsel %vm448, %v452, %v453
    %v455 = vrot.slane %v312, 3
    %v456 = vrot.slane %v327, 3
    %457 = vset.pattern.permute.xlu0 0
    %458 = vperm.xlu0 %457, %v300
    %v459 = vpop.permute.xlu0 %458
    %460 = vset.pattern.permute.xlu0 0
    %461 = vperm.xlu0 %460, %v315
    %v462 = vpop.permute.xlu0 %461
    %463 = vset.pattern.permute.xlu0 0
    %464 = vperm.xlu0 %463, %v420
    %v465 = vpop.permute.xlu0 %464
    %466 = vset.pattern.permute.xlu0 0
    %467 = vperm.xlu0 %466, %v423
    %v468 = vpop.permute.xlu0 %467
    %469 = vset.pattern.permute.xlu0 0
    %470 = vperm.xlu0 %469, %v424
    %v471 = vpop.permute.xlu0 %470
    %472 = vset.pattern.permute.xlu0 0
    %473 = vperm.xlu0 %472, %v425
    %v474 = vpop.permute.xlu0 %473
    %475 = vset.pattern.permute.xlu0 0
    %476 = vperm.xlu0 %475, %v431
    %v477 = vpop.permute.xlu0 %476
    %478 = vset.pattern.permute.xlu0 0
    %479 = vperm.xlu0 %478, %v434
    %v480 = vpop.permute.xlu0 %479
    %481 = vset.pattern.permute.xlu0 0
    %482 = vperm.xlu0 %481, %v440
    %v483 = vpop.permute.xlu0 %482
    %484 = vset.pattern.permute.xlu0 0
    %485 = vperm.xlu0 %484, %v443
    %v486 = vpop.permute.xlu0 %485
    %487 = vset.pattern.permute.xlu0 0
    %488 = vperm.xlu0 %487, %v444
    %v489 = vpop.permute.xlu0 %488
    %490 = vset.pattern.permute.xlu0 0
    %491 = vperm.xlu0 %490, %v445
    %v492 = vpop.permute.xlu0 %491
    %493 = vset.pattern.permute.xlu0 0
    %494 = vperm.xlu0 %493, %v451
    %v495 = vpop.permute.xlu0 %494
    %496 = vset.pattern.permute.xlu0 0
    %497 = vperm.xlu0 %496, %v454
    %v498 = vpop.permute.xlu0 %497
    %499 = vset.pattern.permute.xlu0 0
    %500 = vperm.xlu0 %499, %v455
    %v501 = vpop.permute.xlu0 %500
    %502 = vset.pattern.permute.xlu0 0
    %503 = vperm.xlu0 %502, %v456
    %v504 = vpop.permute.xlu0 %503
    %v505 = vlaneseq
    %v506 = vand.u32 %v505, 127
    %v507 = vperm.slane %v459, %v506
    %v508 = vperm.slane %v462, %v506
    %v509 = vperm.slane %v465, %v506
    %v510 = vperm.slane %v468, %v506
    %v511 = vperm.slane %v471, %v506
    %v512 = vperm.slane %v474, %v506
    %v513 = vperm.slane %v477, %v506
    %v514 = vperm.slane %v480, %v506
    %v515 = vperm.slane %v483, %v506
    %v516 = vperm.slane %v486, %v506
    %v517 = vperm.slane %v489, %v506
    %v518 = vperm.slane %v492, %v506
    %v519 = vperm.slane %v495, %v506
    %v520 = vperm.slane %v498, %v506
    %v521 = vperm.slane %v501, %v506
    %v522 = vperm.slane %v504, %v506
    %vm523 = vcmask 1041409
    %v524 = vsel %vm523, %v508, %v507
    %v525 = vsel %vm523, %v510, %v509
    %v526 = vsel %vm523, %v512, %v511
    %v527 = vsel %vm523, %v514, %v513
    %v528 = vsel %vm523, %v516, %v515
    %v529 = vsel %vm523, %v518, %v517
    %v530 = vsel %vm523, %v520, %v519
    %v531 = vsel %vm523, %v522, %v521
    %v540 = vrot.slane %v526, 4
    %vm541 = vcmask 1047556
    %v542 = vsel %vm541, %v540, %v524
    %v544 = vunpack.c.l.s4 1983009808
    %v545 = vunpack.c.0.s8 %v544
    %v546 = vperm.slane %v542, %v545
    %v547 = vrot.slane %v527, 4
    %v548 = vsel %vm541, %v547, %v525
    %v550 = vunpack.c.l.s4 1983009808
    %v551 = vunpack.c.0.s8 %v550
    %v552 = vperm.slane %v548, %v551
    %v553 = vrot.slane %v530, 4
    %v554 = vsel %vm541, %v553, %v528
    %v556 = vunpack.c.l.s4 1983009808
    %v557 = vunpack.c.0.s8 %v556
    %v558 = vperm.slane %v554, %v557
    %v559 = vrot.slane %v531, 4
    %v560 = vsel %vm541, %v559, %v529
    %v562 = vunpack.c.l.s4 1983009808
    %v563 = vunpack.c.0.s8 %v562
    %v564 = vperm.slane %v560, %v563
    %v565 = vrot.slane %v552, 4
    %v566 = vsel %vm541, %v565, %v546
    %v568 = vunpack.c.l.s4 1934713408
    %v569 = vunpack.c.0.s8 %v568
    %v570 = vperm.slane %v566, %v569
    %v571 = vrot.slane %v564, 4
    %v572 = vsel %vm541, %v571, %v558
    %v574 = vunpack.c.l.s4 1934713408
    %v575 = vunpack.c.0.s8 %v574
    %v576 = vperm.slane %v572, %v575
    %v577 = vrot.slane %v576, 4
    %v578 = vsel %vm541, %v577, %v570
    %v579 = vrot.slane %v570, 4
    %v580 = vsel %vm541, %v576, %v579
    %v585 = vrot.slane %v340, 5
    %v586 = vrot.slane %v343, 5
    %v587 = vsel %vm417, %v585, %v586
    %v588 = vrot.slane %v355, 5
    %v589 = vrot.slane %v358, 5
    %v590 = vsel %vm417, %v588, %v589
    %v591 = vrot.slane %v343, 2
    %v592 = vrot.slane %v358, 2
    %v595 = vrot.slane %v343, 7
    %v596 = vrot.slane %v346, 7
    %v597 = vsel %vm428, %v595, %v596
    %v598 = vrot.slane %v358, 7
    %v599 = vrot.slane %v361, 7
    %v600 = vsel %vm428, %v598, %v599
    %v603 = vrot.slane %v346, 4
    %v604 = vrot.slane %v349, 4
    %v605 = vsel %vm437, %v603, %v604
    %v606 = vrot.slane %v361, 4
    %v607 = vrot.slane %v364, 4
    %v608 = vsel %vm437, %v606, %v607
    %v609 = vrot.slane %v349, 1
    %v610 = vrot.slane %v364, 1
    %v613 = vrot.slane %v349, 6
    %v614 = vrot.slane %v352, 6
    %v615 = vsel %vm448, %v613, %v614
    %v616 = vrot.slane %v364, 6
    %v617 = vrot.slane %v367, 6
    %v618 = vsel %vm448, %v616, %v617
    %v619 = vrot.slane %v352, 3
    %v620 = vrot.slane %v367, 3
    %621 = vset.pattern.permute.xlu0 0
    %622 = vperm.xlu0 %621, %v340
    %v623 = vpop.permute.xlu0 %622
    %624 = vset.pattern.permute.xlu0 0
    %625 = vperm.xlu0 %624, %v355
    %v626 = vpop.permute.xlu0 %625
    %627 = vset.pattern.permute.xlu0 0
    %628 = vperm.xlu0 %627, %v587
    %v629 = vpop.permute.xlu0 %628
    %630 = vset.pattern.permute.xlu0 0
    %631 = vperm.xlu0 %630, %v590
    %v632 = vpop.permute.xlu0 %631
    %633 = vset.pattern.permute.xlu0 0
    %634 = vperm.xlu0 %633, %v591
    %v635 = vpop.permute.xlu0 %634
    %636 = vset.pattern.permute.xlu0 0
    %637 = vperm.xlu0 %636, %v592
    %v638 = vpop.permute.xlu0 %637
    %639 = vset.pattern.permute.xlu0 0
    %640 = vperm.xlu0 %639, %v597
    %v641 = vpop.permute.xlu0 %640
    %642 = vset.pattern.permute.xlu0 0
    %643 = vperm.xlu0 %642, %v600
    %v644 = vpop.permute.xlu0 %643
    %645 = vset.pattern.permute.xlu0 0
    %646 = vperm.xlu0 %645, %v605
    %v647 = vpop.permute.xlu0 %646
    %648 = vset.pattern.permute.xlu0 0
    %649 = vperm.xlu0 %648, %v608
    %v650 = vpop.permute.xlu0 %649
    %651 = vset.pattern.permute.xlu0 0
    %652 = vperm.xlu0 %651, %v609
    %v653 = vpop.permute.xlu0 %652
    %654 = vset.pattern.permute.xlu0 0
    %655 = vperm.xlu0 %654, %v610
    %v656 = vpop.permute.xlu0 %655
    %657 = vset.pattern.permute.xlu0 0
    %658 = vperm.xlu0 %657, %v615
    %v659 = vpop.permute.xlu0 %658
    %660 = vset.pattern.permute.xlu0 0
    %661 = vperm.xlu0 %660, %v618
    %v662 = vpop.permute.xlu0 %661
    %663 = vset.pattern.permute.xlu0 0
    %664 = vperm.xlu0 %663, %v619
    %v665 = vpop.permute.xlu0 %664
    %666 = vset.pattern.permute.xlu0 0
    %667 = vperm.xlu0 %666, %v620
    %v668 = vpop.permute.xlu0 %667
    %v669 = vperm.slane %v623, %v506
    %v670 = vperm.slane %v626, %v506
    %v671 = vperm.slane %v629, %v506
    %v672 = vperm.slane %v632, %v506
    %v673 = vperm.slane %v635, %v506
    %v674 = vperm.slane %v638, %v506
    %v675 = vperm.slane %v641, %v506
    %v676 = vperm.slane %v644, %v506
    %v677 = vperm.slane %v647, %v506
    %v678 = vperm.slane %v650, %v506
    %v679 = vperm.slane %v653, %v506
    %v680 = vperm.slane %v656, %v506
    %v681 = vperm.slane %v659, %v506
    %v682 = vperm.slane %v662, %v506
    %v683 = vperm.slane %v665, %v506
    %v684 = vperm.slane %v668, %v506
    %v685 = vsel %vm523, %v670, %v669
    %v686 = vsel %vm523, %v672, %v671
    %v687 = vsel %vm523, %v674, %v673
    %v688 = vsel %vm523, %v676, %v675
    %v689 = vsel %vm523, %v678, %v677
    %v690 = vsel %vm523, %v680, %v679
    %v691 = vsel %vm523, %v682, %v681
    %v692 = vsel %vm523, %v684, %v683
    %v701 = vrot.slane %v687, 4
    %v702 = vsel %vm541, %v701, %v685
    %v704 = vunpack.c.l.s4 1983009808
    %v705 = vunpack.c.0.s8 %v704
    %v706 = vperm.slane %v702, %v705
    %v707 = vrot.slane %v688, 4
    %v708 = vsel %vm541, %v707, %v686
    %v710 = vunpack.c.l.s4 1983009808
    %v711 = vunpack.c.0.s8 %v710
    %v712 = vperm.slane %v708, %v711
    %v713 = vrot.slane %v691, 4
    %v714 = vsel %vm541, %v713, %v689
    %v716 = vunpack.c.l.s4 1983009808
    %v717 = vunpack.c.0.s8 %v716
    %v718 = vperm.slane %v714, %v717
    %v719 = vrot.slane %v692, 4
    %v720 = vsel %vm541, %v719, %v690
    %v722 = vunpack.c.l.s4 1983009808
    %v723 = vunpack.c.0.s8 %v722
    %v724 = vperm.slane %v720, %v723
    %v725 = vrot.slane %v712, 4
    %v726 = vsel %vm541, %v725, %v706
    %v728 = vunpack.c.l.s4 1934713408
    %v729 = vunpack.c.0.s8 %v728
    %v730 = vperm.slane %v726, %v729
    %v731 = vrot.slane %v724, 4
    %v732 = vsel %vm541, %v731, %v718
    %v734 = vunpack.c.l.s4 1934713408
    %v735 = vunpack.c.0.s8 %v734
    %v736 = vperm.slane %v732, %v735
    %v737 = vrot.slane %v736, 4
    %v738 = vsel %vm541, %v737, %v730
    %v739 = vrot.slane %v730, 4
    %v740 = vsel %vm541, %v736, %v739
    %v745 = vrot.slane %v385, 5
    %v746 = vrot.slane %v388, 5
    %v747 = vsel %vm417, %v745, %v746
    %v748 = vrot.slane %v400, 5
    %v749 = vrot.slane %v403, 5
    %v750 = vsel %vm417, %v748, %v749
    %v751 = vrot.slane %v388, 2
    %v752 = vrot.slane %v403, 2
    %v755 = vrot.slane %v388, 7
    %v756 = vrot.slane %v391, 7
    %v757 = vsel %vm428, %v755, %v756
    %v758 = vrot.slane %v403, 7
    %v759 = vrot.slane %v406, 7
    %v760 = vsel %vm428, %v758, %v759
    %v763 = vrot.slane %v391, 4
    %v764 = vrot.slane %v394, 4
    %v765 = vsel %vm437, %v763, %v764
    %v766 = vrot.slane %v406, 4
    %v767 = vrot.slane %v409, 4
    %v768 = vsel %vm437, %v766, %v767
    %v769 = vrot.slane %v394, 1
    %v770 = vrot.slane %v409, 1
    %v773 = vrot.slane %v394, 6
    %v774 = vrot.slane %v397, 6
    %v775 = vsel %vm448, %v773, %v774
    %v776 = vrot.slane %v409, 6
    %v777 = vrot.slane %v412, 6
    %v778 = vsel %vm448, %v776, %v777
    %v779 = vrot.slane %v397, 3
    %v780 = vrot.slane %v412, 3
    %781 = vset.pattern.permute.xlu0 0
    %782 = vperm.xlu0 %781, %v385
    %v783 = vpop.permute.xlu0 %782
    %784 = vset.pattern.permute.xlu0 0
    %785 = vperm.xlu0 %784, %v400
    %v786 = vpop.permute.xlu0 %785
    %787 = vset.pattern.permute.xlu0 0
    %788 = vperm.xlu0 %787, %v747
    %v789 = vpop.permute.xlu0 %788
    %790 = vset.pattern.permute.xlu0 0
    %791 = vperm.xlu0 %790, %v750
    %v792 = vpop.permute.xlu0 %791
    %793 = vset.pattern.permute.xlu0 0
    %794 = vperm.xlu0 %793, %v751
    %v795 = vpop.permute.xlu0 %794
    %796 = vset.pattern.permute.xlu0 0
    %797 = vperm.xlu0 %796, %v752
    %v798 = vpop.permute.xlu0 %797
    %799 = vset.pattern.permute.xlu0 0
    %800 = vperm.xlu0 %799, %v757
    %v801 = vpop.permute.xlu0 %800
    %802 = vset.pattern.permute.xlu0 0
    %803 = vperm.xlu0 %802, %v760
    %v804 = vpop.permute.xlu0 %803
    %805 = vset.pattern.permute.xlu0 0
    %806 = vperm.xlu0 %805, %v765
    %v807 = vpop.permute.xlu0 %806
    %808 = vset.pattern.permute.xlu0 0
    %809 = vperm.xlu0 %808, %v768
    %v810 = vpop.permute.xlu0 %809
    %811 = vset.pattern.permute.xlu0 0
    %812 = vperm.xlu0 %811, %v769
    %v813 = vpop.permute.xlu0 %812
    %814 = vset.pattern.permute.xlu0 0
    %815 = vperm.xlu0 %814, %v770
    %v816 = vpop.permute.xlu0 %815
    %817 = vset.pattern.permute.xlu0 0
    %818 = vperm.xlu0 %817, %v775
    %v819 = vpop.permute.xlu0 %818
    %820 = vset.pattern.permute.xlu0 0
    %821 = vperm.xlu0 %820, %v778
    %v822 = vpop.permute.xlu0 %821
    %823 = vset.pattern.permute.xlu0 0
    %824 = vperm.xlu0 %823, %v779
    %v825 = vpop.permute.xlu0 %824
    %826 = vset.pattern.permute.xlu0 0
    %827 = vperm.xlu0 %826, %v780
    %v828 = vpop.permute.xlu0 %827
    %v829 = vperm.slane %v783, %v506
    %v830 = vperm.slane %v786, %v506
    %v831 = vperm.slane %v789, %v506
    %v832 = vperm.slane %v792, %v506
    %v833 = vperm.slane %v795, %v506
    %v834 = vperm.slane %v798, %v506
    %v835 = vperm.slane %v801, %v506
    %v836 = vperm.slane %v804, %v506
    %v837 = vperm.slane %v807, %v506
    %v838 = vperm.slane %v810, %v506
    %v839 = vperm.slane %v813, %v506
    %v840 = vperm.slane %v816, %v506
    %v841 = vperm.slane %v819, %v506
    %v842 = vperm.slane %v822, %v506
    %v843 = vperm.slane %v825, %v506
    %v844 = vperm.slane %v828, %v506
    %v845 = vsel %vm523, %v830, %v829
    %v846 = vsel %vm523, %v832, %v831
    %v847 = vsel %vm523, %v834, %v833
    %v848 = vsel %vm523, %v836, %v835
    %v849 = vsel %vm523, %v838, %v837
    %v850 = vsel %vm523, %v840, %v839
    %v851 = vsel %vm523, %v842, %v841
    %v852 = vsel %vm523, %v844, %v843
    %v861 = vrot.slane %v847, 4
    %v862 = vsel %vm541, %v861, %v845
    %v864 = vunpack.c.l.s4 1983009808
    %v865 = vunpack.c.0.s8 %v864
    %v866 = vperm.slane %v862, %v865
    %v867 = vrot.slane %v848, 4
    %v868 = vsel %vm541, %v867, %v846
    %v870 = vunpack.c.l.s4 1983009808
    %v871 = vunpack.c.0.s8 %v870
    %v872 = vperm.slane %v868, %v871
    %v873 = vrot.slane %v851, 4
    %v874 = vsel %vm541, %v873, %v849
    %v876 = vunpack.c.l.s4 1983009808
    %v877 = vunpack.c.0.s8 %v876
    %v878 = vperm.slane %v874, %v877
    %v879 = vrot.slane %v852, 4
    %v880 = vsel %vm541, %v879, %v850
    %v882 = vunpack.c.l.s4 1983009808
    %v883 = vunpack.c.0.s8 %v882
    %v884 = vperm.slane %v880, %v883
    %v885 = vrot.slane %v872, 4
    %v886 = vsel %vm541, %v885, %v866
    %v888 = vunpack.c.l.s4 1934713408
    %v889 = vunpack.c.0.s8 %v888
    %v890 = vperm.slane %v886, %v889
    %v891 = vrot.slane %v884, 4
    %v892 = vsel %vm541, %v891, %v878
    %v894 = vunpack.c.l.s4 1934713408
    %v895 = vunpack.c.0.s8 %v894
    %v896 = vperm.slane %v892, %v895
    %v897 = vrot.slane %v896, 4
    %v898 = vsel %vm541, %v897, %v890
    %v899 = vrot.slane %v890, 4
    %v900 = vsel %vm541, %v896, %v899
    %vm901 = vcmask 39936
    %v902 = vsel %vm901, %v578, 0.0
    %903 = vadd.xlane.f32.xlu0 %v902
    %v904 = vpop.xlane.xlu0 %903
    %v905 = vsel %vm901, %v580, 0.0
    %906 = vadd.xlane.f32.xlu0 %v905
    %v907 = vpop.xlane.xlu0 %906
    %v908 = vmul.f32 %v904, 0.00625
    %v909 = vmul.f32 %v907, 0.00625
    %v910 = vsel %vm901, %v738, 0.0
    %911 = vadd.xlane.f32.xlu0 %v910
    %v912 = vpop.xlane.xlu0 %911
    %v913 = vsel %vm901, %v740, 0.0
    %914 = vadd.xlane.f32.xlu0 %v913
    %v915 = vpop.xlane.xlu0 %914
    %v916 = vmul.f32 %v912, 0.00625
    %v917 = vmul.f32 %v915, 0.00625
    %v918 = vmul.f32 %v908, %v908
    %v919 = vmul.f32 %v909, %v909
    %v920 = vsub.f32 %v916, %v918
    %v921 = vsub.f32 %v917, %v919
    %v922 = vadd.f32 %v920, 1e-05
    %v923 = vadd.f32 %v921, 1e-05
    %v924 = vrsqrt.pop %v922
    %v925 = vmul.f32 %v924, %v922
    %v926 = vmul.f32 %v925, %v924
    %v927 = vmul.f32 0.5, %v926
    %v928 = vsub.f32 1.5, %v927
    %v929 = vmul.f32 %v924, %v928
    %vm930 = vweird.f32 %v922
    %vm931 = vweird.f32 %v924
    %vm932 = vmor %vm930, %vm931
    %v933 = vsel %vm932, %v924, %v929
    %v934 = vrsqrt.pop %v923
    %v935 = vmul.f32 %v934, %v923
    %v936 = vmul.f32 %v935, %v934
    %v937 = vmul.f32 0.5, %v936
    %v938 = vsub.f32 1.5, %v937
    %v939 = vmul.f32 %v934, %v938
    %vm940 = vweird.f32 %v923
    %vm941 = vweird.f32 %v934
    %vm942 = vmor %vm940, %vm941
    %v943 = vsel %vm942, %v934, %v939
    %v944 = vld [vmem:[%s6] sm:$0x1]
    %v945 = vld [vmem:[%s7] sm:$0x1]
    %v947 = vperm.slane %v944, 0
    %v949 = vmul.f32 %v908, %v947
    %v950 = vmul.f32 %v909, %v947
    %v951 = vsub.f32 %v898, %v949
    %v952 = vsub.f32 %v900, %v950
    %v953 = vmul.f32 %v933, %v951
    %v954 = vmul.f32 %v943, %v952
    %v956 = vperm.slane %v945, 0
    %v958 = vadd.f32 %v953, %v956
    %v959 = vadd.f32 %v954, %v956
    %v960 = vxor.u32 %v958, 2147483648
    %v961 = vxor.u32 %v959, 2147483648
    %v962 = vmul.f32 %v960, 1.442695
    %v963 = vpow.pop %v962
    %v964 = vmul.f32 %v961, 1.442695
    %v965 = vpow.pop %v964
    %v966 = vadd.f32 %v963, 1.0
    %v967 = vadd.f32 %v965, 1.0
    %v968 = vrcp.pop %v966
    %v969 = vmul.f32 %v966, %v968
    %v970 = vsub.f32 1.0, %v969
    %v971 = vmul.f32 %v968, %v970
    %v972 = vadd.f32 %v968, %v971
    %vm973 = vweird.f32 %v966
    %vm974 = vweird.f32 %v968
    %vm975 = vmor %vm973, %vm974
    %v976 = vsel %vm975, %v968, %v972
    %v977 = vand.u32 2147483647, %v966
    %vm978 = vcmp.eq.f32.partialorder %v977, 8.507059e+37
    %v979 = vand.u32 %v966, 2147483648
    %v980 = vor.u32 1.1754944e-38, %v979
    %v981 = vsel %vm978, %v980, %v976
    %v982 = vmul.f32 1.0, %v981
    %v983 = vrcp.pop %v967
    %v984 = vmul.f32 %v967, %v983
    %v985 = vsub.f32 1.0, %v984
    %v986 = vmul.f32 %v983, %v985
    %v987 = vadd.f32 %v983, %v986
    %vm988 = vweird.f32 %v967
    %vm989 = vweird.f32 %v983
    %vm990 = vmor %vm988, %vm989
    %v991 = vsel %vm990, %v983, %v987
    %v992 = vand.u32 2147483647, %v967
    %vm993 = vcmp.eq.f32.partialorder %v992, 8.507059e+37
    %v994 = vand.u32 %v967, 2147483648
    %v995 = vor.u32 1.1754944e-38, %v994
    %v996 = vsel %vm993, %v995, %v991
    %v997 = vmul.f32 1.0, %v996
    %v998 = vsel %vm901, %v982, 0.0
    %999 = vadd.xlane.f32.xlu0 %v998
    %v1000 = vpop.xlane.xlu0 %999
    %v1001 = vsel %vm901, %v997, 0.0
    %1002 = vadd.xlane.f32.xlu0 %v1001
    %v1003 = vpop.xlane.xlu0 %1002
    %v1006 = vperm.slane %v1000, %v506
    %v1007 = vperm.slane %v1003, %v506
    %v1008 = vsel %vm523, %v1007, %v1006
    %vm1010 = vcmask 58368
    %v1011 = vsel %vm1010, %v1008, -inf
    %1012 = vmax.xlane.f32.xlu0 %v1011
    %v1013 = vpop.xlane.xlu0 %1012
    %v1015 = vperm.slane %v1013, 0
    %v1016 = vperm.slane %v1013, 1
    %v1019 = vsub.f32 %v1000, %v1015
    %v1020 = vsub.f32 %v1003, %v1016
    %v1021 = vmul.f32 %v1019, 1.442695
    %v1022 = vpow.pop %v1021
    %v1023 = vmul.f32 %v1020, 1.442695
    %v1024 = vpow.pop %v1023
    %1027 = vset.pattern.permute.xlu0 0
    %1028 = vperm.xlu0 %1027, %v1022
    %v1029 = vpop.permute.xlu0 %1028
    %1030 = vset.pattern.permute.xlu0 0
    %1031 = vperm.xlu0 %1030, %v1024
    %v1032 = vpop.permute.xlu0 %1031
    %v1033 = vperm.slane %v1029, %v506
    %v1034 = vperm.slane %v1032, %v506
    %v1035 = vsel %vm523, %v1034, %v1033
    %v1037 = vsel %vm1010, %v1035, 0.0
    %1038 = vadd.xlane.f32.xlu0 %v1037
    %v1039 = vpop.xlane.xlu0 %1038
    %v1040 = vrcp.pop %v1039
    %v1042 = vperm.slane %v1040, 0
    %v1043 = vperm.slane %v1040, 1
    %v1046 = vmul.f32 %v1022, %v1042
    %v1047 = vmul.f32 %v1024, %v1043
    %1050 = vset.pattern.permute.xlu0 0
    %1051 = vperm.xlu0 %1050, %v1046
    %v1052 = vpop.permute.xlu0 %1051
    %1053 = vset.pattern.permute.xlu0 0
    %1054 = vperm.xlu0 %1053, %v1047
    %v1055 = vpop.permute.xlu0 %1054
    %v1056 = vperm.slane %v1052, %v506
    %v1057 = vperm.slane %v1055, %v506
    %v1058 = vsel %vm523, %v1057, %v1056
    %1060 = vst.msk [vmem:[#allocation2] sm:$0x3] %vm1010, %v1058
    // Predicated region
    $region34: #{tpu_custom_call.1} parent=1 // pred_check
      _
    $region35: #{tpu_custom_call.1} parent=1 // pred_check_branch
      %1062 = sbr.rel (0) target = $region37
    $region36: #{tpu_custom_call.1} parent=1 // pred_region
      %1064 = vsyncadd [#allocation3], 0
      %s1066 = sshll.u32 [#allocation2], 4
      %s1067 = int_to_ptr.vmem [resolvable:$true] %s1066
      %s1068 = sshll.u32 %s8, 4
      %s1069 = int_to_ptr.hbm [resolvable:$true] %s1068
      %1071 = dma.vmem_to_hbm [thread:$0]  %s1067, 32, %s1069, [#allocation3]
    $region37: #{tpu_custom_call.1} parent=1 // pred_fallthru
      _
    // Predicated region
    $region38: #{tpu_custom_call.1} parent=1 // pred_check
      _
    $region39: #{tpu_custom_call.1} parent=1 // pred_check_branch
      %1073 = sbr.rel (0) target = $region41
    $region40: #{tpu_custom_call.1} parent=1 // pred_region
      %1075 = dma.done [#allocation3], 32
    $region41: #{tpu_custom_call.1} parent=1 // pred_fallthru
      _
    %1076 = vsyncpa [#allocation3], 1

</llo_original>
